<compile_context>
chip_gen: v5e
topology: v5e:2x2
jax: 0.10.0
libtpu: 0.0.40
codegen_flags: <defaults>
</compile_context>

<pallas_src>
import functools

import jax
import jax.numpy as jnp
from jax.experimental import pallas as pl
from jax.experimental.pallas import tpu as pltpu

_LANE = 128
_MAX_TILE_ROWS = 2048  # 2048 x 128 x 4 B = 1 MiB per f32 tile (x2 buffers in/out)


def _dropout_kernel(seed_ref, x_ref, o_ref, *, keep_prob: float, tile_rows: int):
    """Inverted dropout on one (tile_rows, 128) lane-dense tile."""
    shape = x_ref.shape
    # Global element index of every lane in this tile.
    row = jax.lax.broadcasted_iota(jnp.uint32, shape, 0)
    col = jax.lax.broadcasted_iota(jnp.uint32, shape, 1)
    row_off = (pl.program_id(0) * tile_rows).astype(jnp.uint32)
    idx = (row + row_off) * jnp.uint32(shape[1]) + col

    # Stateless hash: seed-offset + murmur3 fmix32 avalanche -> uniform u32.
    seed = seed_ref[0].astype(jnp.uint32)
    h = idx + seed * jnp.uint32(0x9E3779B9)
    h = h ^ (h >> 16)
    h = h * jnp.uint32(0x85EBCA6B)
    h = h ^ (h >> 13)
    h = h * jnp.uint32(0xC2B2AE35)
    h = h ^ (h >> 16)

    # keep iff uniform_u32 < keep_prob * 2^32 (clamped so it never wraps to 0)
    threshold = jnp.uint32(min(int(keep_prob * 4294967296.0), 4294967295))
    keep = h < threshold

    # One select + one multiply, in the input dtype (no f32 round-trip).
    scale = jnp.asarray(1.0 / keep_prob, dtype=x_ref.dtype)
    zero = jnp.asarray(0.0, dtype=x_ref.dtype)
    o_ref[...] = x_ref[...] * jnp.where(keep, scale, zero)


def dropout(x, p: float, training: bool = True, seed: int = 0):
    """Pallas equivalent of torch.dropout(x, p, training)."""
    if not training or p == 0.0:
        return x
    if p >= 1.0:
        return jnp.zeros_like(x)

    keep_prob = 1.0 - float(p)
    orig_shape = x.shape
    total = x.size

    # Flatten to a lane-dense (rows_padded, 128) slab tiled along rows.
    rows = -(-total // _LANE)
    if rows <= _MAX_TILE_ROWS:
        tile_rows = -(-rows // 8) * 8          # single tile, rounded to (8, 128)
        rows_padded = tile_rows
    else:
        tile_rows = _MAX_TILE_ROWS
        rows_padded = -(-rows // tile_rows) * tile_rows
    padded_total = rows_padded * _LANE

    x_flat = jnp.ravel(x)
    if padded_total != total:
        # TODO(synk): handle the ragged tail in-kernel (SMEM length + mask)
        # instead of pad+slice to avoid the extra HBM copies on this path.
        x_flat = jnp.pad(x_flat, (0, padded_total - total))
    x2d = x_flat.reshape(rows_padded, _LANE)

    seed_arr = jnp.array([seed], dtype=jnp.int32)
    grid = (rows_padded // tile_rows,)

    kernel = functools.partial(_dropout_kernel,
                               keep_prob=keep_prob, tile_rows=tile_rows)
    out2d = pl.pallas_call(
        kernel,
        out_shape=jax.ShapeDtypeStruct(x2d.shape, x.dtype),
        grid=grid,
        in_specs=[
            pl.BlockSpec(memory_space=pltpu.SMEM),               # seed scalar
            pl.BlockSpec((tile_rows, _LANE), lambda i: (i, 0)),  # lane-dense tile
        ],
        out_specs=pl.BlockSpec((tile_rows, _LANE), lambda i: (i, 0)),
        compiler_params=pltpu.CompilerParams(
            dimension_semantics=("parallel",)),
    )(seed_arr, x2d)

    if padded_total == total:
        return out2d.reshape(orig_shape)
    return out2d.reshape(-1)[:total].reshape(orig_shape)


if __name__ == "__main__":
    key = jax.random.PRNGKey(0)
    k1, k2 = jax.random.split(key)

    p = 0.5

    # Small NCHW-like input consistent with the module's elementwise forward.
    x = jax.random.normal(k1, (2, 4, 16, 16), dtype=jnp.float32)

    # Training mode: random mask + 1/(1-p) scaling, computed inside the kernel.
    y_train = jax.block_until_ready(dropout(x, p, training=True, seed=42))
    # Eval mode: identity (matches torch.dropout with training=False).
    y_eval = jax.block_until_ready(dropout(x, p, training=False))

    assert y_train.shape == x.shape and y_train.dtype == x.dtype
    assert jnp.allclose(y_eval, x)
    # Surviving elements are exactly x / (1 - p); dropped ones are exactly 0.
    mask = y_train != 0
    assert jnp.allclose(jnp.where(mask, y_train, 0.0),
                        jnp.where(mask, x / (1.0 - p), 0.0), atol=1e-5)

    # Larger bf16 input that exercises the multi-tile grid path.
    xb = jax.random.normal(k2, (8, 64, 32, 32), dtype=jnp.bfloat16)
    yb = jax.block_until_ready(dropout(xb, p, training=True, seed=7))
    assert yb.shape == xb.shape and yb.dtype == xb.dtype
    maskb = yb != 0
    frac_kept = float(jnp.mean(maskb.astype(jnp.float32)))
    assert 0.4 < frac_kept < 0.6
    assert jnp.allclose(jnp.where(maskb, yb.astype(jnp.float32), 0.0),
                        jnp.where(maskb, xb.astype(jnp.float32) / (1.0 - p), 0.0),
                        atol=1e-2, rtol=1e-2)

    print("KERNEL_OK")
</pallas_src>

<mosaic_0001>
module attributes {stable_mosaic.version = 11 : i64} {
  func.func @_dropout_kernel(%arg0: i32, %arg1: memref<1xi32, #tpu.memory_space<smem>>, %arg2: memref<16x128xf32, #tpu.memory_space<vmem>>, %arg3: memref<16x128xf32, #tpu.memory_space<vmem>>) attributes {dimension_semantics = [#tpu.dimension_semantics<parallel>], iteration_bounds = array<i64: 1>, scalar_prefetch = 0 : i64, scratch_operands = 0 : i64, tpu.core_type = #tpu.core_type<tc>, window_params = [{transform_indices = @transform_0, window_bounds = array<i64: 1>}, {transform_indices = @transform_1, window_bounds = array<i64: 16, 128>}, {transform_indices = @transform_2, window_bounds = array<i64: 16, 128>}]} {
    %0 = tpu.iota {dimensions = array<i32: 0>} : vector<16x128xi32>
    %1 = tpu.iota {dimensions = array<i32: 1>} : vector<16x128xi32>
    %c16_i32 = arith.constant 16 : i32
    %2 = arith.muli %arg0, %c16_i32 : i32
    %3 = vector.broadcast %2 : i32 to vector<16x128xi32>
    %4 = arith.addi %0, %3 : vector<16x128xi32>
    %c128_i32 = arith.constant 128 : i32
    %5 = vector.broadcast %c128_i32 : i32 to vector<16x128xi32>
    %6 = arith.muli %4, %5 : vector<16x128xi32>
    %7 = arith.addi %6, %1 : vector<16x128xi32>
    %c0 = arith.constant 0 : index
    %8 = memref.load %arg1[%c0] : memref<1xi32, #tpu.memory_space<smem>>
    %c-1640531527_i32 = arith.constant -1640531527 : i32
    %9 = arith.muli %8, %c-1640531527_i32 : i32
    %10 = vector.broadcast %9 : i32 to vector<16x128xi32>
    %11 = arith.addi %7, %10 : vector<16x128xi32>
    %c16_i32_0 = arith.constant 16 : i32
    %12 = vector.broadcast %c16_i32_0 : i32 to vector<16x128xi32>
    %13 = arith.shrui %11, %12 : vector<16x128xi32>
    %14 = arith.xori %11, %13 : vector<16x128xi32>
    %c-2048144789_i32 = arith.constant -2048144789 : i32
    %15 = vector.broadcast %c-2048144789_i32 : i32 to vector<16x128xi32>
    %16 = arith.muli %14, %15 : vector<16x128xi32>
    %c13_i32 = arith.constant 13 : i32
    %17 = vector.broadcast %c13_i32 : i32 to vector<16x128xi32>
    %18 = arith.shrui %16, %17 : vector<16x128xi32>
    %19 = arith.xori %16, %18 : vector<16x128xi32>
    %c-1028477387_i32 = arith.constant -1028477387 : i32
    %20 = vector.broadcast %c-1028477387_i32 : i32 to vector<16x128xi32>
    %21 = arith.muli %19, %20 : vector<16x128xi32>
    %c16_i32_1 = arith.constant 16 : i32
    %22 = vector.broadcast %c16_i32_1 : i32 to vector<16x128xi32>
    %23 = arith.shrui %21, %22 : vector<16x128xi32>
    %24 = arith.xori %21, %23 : vector<16x128xi32>
    %c-2147483648_i32 = arith.constant -2147483648 : i32
    %25 = vector.broadcast %c-2147483648_i32 : i32 to vector<16x128xi32>
    %26 = arith.cmpi ult, %24, %25 : vector<16x128xi32>
    %c0_2 = arith.constant 0 : index
    %c0_3 = arith.constant 0 : index
    %27 = vector.load %arg2[%c0_2, %c0_3] : memref<16x128xf32, #tpu.memory_space<vmem>>, vector<16x128xf32>
    %cst = arith.constant 2.000000e+00 : f32
    %cst_4 = arith.constant 0.000000e+00 : f32
    %28 = vector.broadcast %cst : f32 to vector<16x128xf32>
    %29 = vector.broadcast %cst_4 : f32 to vector<16x128xf32>
    %30 = arith.select %26, %28, %29 : vector<16x128xi1>, vector<16x128xf32>
    %31 = arith.mulf %27, %30 : vector<16x128xf32>
    %c0_5 = arith.constant 0 : index
    %c0_6 = arith.constant 0 : index
    %32 = vector.load %arg3[%c0_5, %c0_6] : memref<16x128xf32, #tpu.memory_space<vmem>>, vector<16x128xf32>
    tpu.vector_store %arg3[%c0_5, %c0_6], %31 {strides = array<i32>} : memref<16x128xf32, #tpu.memory_space<vmem>>, vector<16x128xf32>,
    return
  }
  func.func @transform_0(%arg0: i32) -> i32 {
    %c0_i32 = arith.constant 0 : i32
    %c0_i32_0 = arith.constant 0 : i32
    return %c0_i32 : i32
  }
  func.func @transform_1(%arg0: i32) -> (i32, i32) {
    %c0_i32 = arith.constant 0 : i32
    %c0_i32_0 = arith.constant 0 : i32
    return %arg0, %c0_i32 : i32, i32
  }
  func.func @transform_2(%arg0: i32) -> (i32, i32) {
    %c0_i32 = arith.constant 0 : i32
    %c0_i32_0 = arith.constant 0 : i32
    return %arg0, %c0_i32 : i32, i32
  }
}

</mosaic_0001>

<llo_original>
// kernel: tpu_custom_call.1
$region0: #{tpu_custom_call.1}
  #allocation0 [shape = 'u32[]', space=smem, size = 0x4, offset = 0x4, fixed_abs, tag = 'smem constant byte address 0x4 - core index']
  #allocation1 [shape = 'u32[72,128]{1,0:T(1,128)}', space=vmem, size = 0x9000, scoped, tag = 'internal scratch']
  #allocation2 [shape = 's32[1]{0:T(128)S(6)}', space=smem, size = 0x200, scoped, tag = 'scoped memory for tpu_custom_call.1']
  %s0 = inlined_call_operand.<no memory space> [shape: s32[1], index: 0, kind: input, shape index: {}]
  %s1 = inlined_call_operand.hbm [shape: f32[16,128], index: 1, kind: input, shape index: {}]
  %s2 = inlined_call_operand.hbm [shape: f32[16,128], index: 2, kind: output, shape index: {}]
  %s3 = sld [smem:[#allocation0]]
  $region22: #{tpu_custom_call.1} parent=0
    _
  %s5 = ssub.s32 1, %s3
  %s6 = scalar_select 0, %s5, %s3
  %7 = sst [smem:[#allocation2]] %s0
  $region1: #{tpu_custom_call.1} parent=0
    #allocation3 [shape = 'u8[8192]{0}', space=vmem, size = 0x2000, scoped, tag = 'input window, operand 1, single buffered']
    #allocation4 [shape = 's32[1]{0}', space=sflag, size = 0x4, scoped, tag = 'scoped memory for tpu_custom_call.1']
    #allocation5 [shape = 's32[1]{0}', space=sflag, size = 0x4, scoped, tag = 'scoped memory for tpu_custom_call.1']
    #allocation6 [shape = 'u8[8192]{0}', space=vmem, size = 0x2000, scoped, tag = 'output window, operand 0, single buffered']
    %8 = vsyncpa [#allocation4], 0
    %9 = vsyncpa [#allocation5], 0
    // Predicated region
    $region2: #{tpu_custom_call.1} parent=1 // pred_check
      _
    $region3: #{tpu_custom_call.1} parent=1 // pred_check_branch
      %11 = sbr.rel (0) target = $region5
    $region4: #{tpu_custom_call.1} parent=1 // pred_region
      _
    $region5: #{tpu_custom_call.1} parent=1 // pred_fallthru
      _
    // Predicated region
    $region6: #{tpu_custom_call.1} parent=1 // pred_check
      _
    $region7: #{tpu_custom_call.1} parent=1 // pred_check_branch
      %13 = sbr.rel (0) target = $region9
    $region8: #{tpu_custom_call.1} parent=1 // pred_region
      %15 = vsyncadd [#allocation4], 0
      %s16 = sshll.u32 %s1, 4
      %s17 = int_to_ptr.hbm [resolvable:$true] %s16
      %s18 = sshll.u32 [#allocation3], 4
      %s19 = int_to_ptr.vmem [resolvable:$true] %s18
      %24 = dma.hbm_to_vmem [thread:$0]  %s17, 256, %s19, [#allocation4], 128, 128, 8
    $region9: #{tpu_custom_call.1} parent=1 // pred_fallthru
      _
    // Predicated region
    $region10: #{tpu_custom_call.1} parent=1 // pred_check
      _
    $region11: #{tpu_custom_call.1} parent=1 // pred_check_branch
      %26 = sbr.rel (0) target = $region13
    $region12: #{tpu_custom_call.1} parent=1 // pred_region
      %28 = dma.done [#allocation4], 256
    $region13: #{tpu_custom_call.1} parent=1 // pred_fallthru
      _
    %v29 = vlaneseq
    %v30 = vshrl.u32 %v29, 7
    %v31 = vadd.s32 %v30, 8
    %v32 = vlaneseq
    %v33 = vand.u32 %v32, 127
    %s34 = smul.u32 0, 16
    %v35 = vstv %s34
    %v36 = vadd.s32 %v30, %v35
    %v37 = vadd.s32 %v31, %v35
    %v38 = vmul.u32 %v36, 128
    %v39 = vmul.u32 %v37, 128
    %v40 = vadd.s32 %v38, %v33
    %v41 = vadd.s32 %v39, %v33
    %s42 = sld [smem:[#allocation2]]
    %s43 = smul.u32 %s42, 2654435769
    %v44 = vstv %s43
    %v45 = vadd.s32 %v40, %v44
    %v46 = vadd.s32 %v41, %v44
    %v47 = vshrl.u32 %v45, 16
    %v48 = vshrl.u32 %v46, 16
    %v49 = vxor.u32 %v45, %v47
    %v50 = vxor.u32 %v46, %v48
    %v51 = vmul.u32 %v49, 2246822507
    %v52 = vmul.u32 %v50, 2246822507
    %v53 = vshrl.u32 %v51, 13
    %v54 = vshrl.u32 %v52, 13
    %v55 = vxor.u32 %v51, %v53
    %v56 = vxor.u32 %v52, %v54
    %v57 = vmul.u32 %v55, 3266489909
    %v58 = vmul.u32 %v56, 3266489909
    %v59 = vshrl.u32 %v57, 16
    %v60 = vshrl.u32 %v58, 16
    %v61 = vxor.u32 %v57, %v59
    %v62 = vxor.u32 %v58, %v60
    %v63 = vadd.s32 %v61, 2147483648
    %vm65 = vcmp.lt.s32.totalorder %v63, 0
    %v66 = vadd.s32 %v62, 2147483648
    %vm68 = vcmp.lt.s32.totalorder %v66, 0
    %v69 = vld [vmem:[#allocation3] sm:$0xff]
    %v70 = vld [vmem:[#allocation3 + $0x8] sm:$0xff]
    %v71 = vsel %vm65, 2.0, 0.0
    %v72 = vsel %vm68, 2.0, 0.0
    %v73 = vmul.f32 %v69, %v71
    %v74 = vmul.f32 %v70, %v72
    %75 = vst [vmem:[#allocation6] sm:$0xff] %v73
    %76 = vst [vmem:[#allocation6 + $0x8] sm:$0xff] %v74
    // Predicated region
    $region14: #{tpu_custom_call.1} parent=1 // pred_check
      _
    $region15: #{tpu_custom_call.1} parent=1 // pred_check_branch
      %78 = sbr.rel (0) target = $region17
    $region16: #{tpu_custom_call.1} parent=1 // pred_region
      %80 = vsyncadd [#allocation5], 0
      %s81 = sshll.u32 [#allocation6], 4
      %s82 = int_to_ptr.vmem [resolvable:$true] %s81
      %s83 = sshll.u32 %s2, 4
      %s84 = int_to_ptr.hbm [resolvable:$true] %s83
      %89 = dma.vmem_to_hbm [thread:$0]  %s82, 256, %s84, [#allocation5], 128, 128, 8
    $region17: #{tpu_custom_call.1} parent=1 // pred_fallthru
      _
    // Predicated region
    $region18: #{tpu_custom_call.1} parent=1 // pred_check
      _
    $region19: #{tpu_custom_call.1} parent=1 // pred_check_branch
      %91 = sbr.rel (0) target = $region21
    $region20: #{tpu_custom_call.1} parent=1 // pred_region
      %93 = dma.done [#allocation5], 256
    $region21: #{tpu_custom_call.1} parent=1 // pred_fallthru
      _
    %94 = vsyncpa [#allocation4], 1
    %95 = vsyncpa [#allocation5], 1

</llo_original>
